<compile_context>
chip_gen: v6e
topology: v6e:2x2x1
jax: 0.10.0
libtpu: 0.0.40
codegen_flags: <defaults>
</compile_context>

<pallas_src>
import functools

import jax
import jax.numpy as jnp
from jax.experimental import pallas as pl
from jax.experimental.pallas import tpu as pltpu

POOL_K = 2  # assumed nn.AvgPool2d(kernel_size=2, stride=2)


def _mpdistance_kernel(alpha_ref, beta_ref, img_ref, txt_ref, out_ref, *, pool_k):
    alpha = alpha_ref[0]
    beta = beta_ref[0]

    # MXU: bf16 (tm, D) @ (D, tn) with f32 accumulation.  txt was pre-transposed in the
    # wrapper, so the contraction is on its leading dim and no per-tile XLU transpose is
    # needed to feed the MXU.
    dist = jnp.dot(img_ref[...], txt_ref[...], preferred_element_type=jnp.float32)

    # sigmoid(y) == 0.5 * (tanh(y / 2) + 1): a single EUP transcendental per element
    # (vs exp + reciprocal), kept in f32 so it is safe on v5e (no bf16 VPU/EUP there).
    z = (alpha * dist + beta) * 0.5
    s = 0.5 * (jnp.tanh(z) + 1.0)

    tm, tn = s.shape
    tmo, tno = tm // pool_k, tn // pool_k

    # 2D average pooling on the VPU.  The wrapper permuted rows/cols of each tile so
    # entries with equal (index % pool_k) are contiguous slabs; pooling is pool_k
    # contiguous slab adds per axis followed by a single scale.
    srow = s[0:tmo, :]
    for c in range(1, pool_k):
        srow = srow + s[c * tmo:(c + 1) * tmo, :]
    pooled = srow[:, 0:tno]
    for c in range(1, pool_k):
        pooled = pooled + srow[:, c * tno:(c + 1) * tno]
    pooled = pooled * (1.0 / (pool_k * pool_k))

    out_ref[...] = pooled.astype(out_ref.dtype)


def _device_defaults():
    """(tm_preferred, tn_preferred, physical VMEM cap in bytes) for the local TPU."""
    try:
        kind = jax.devices()[0].device_kind.lower()
    except Exception:  # pragma: no cover - defensive
        kind = ""
    if "v5 lite" in kind or "v5e" in kind or "v5lite" in kind:
        return 512, 512, 128 << 20          # ~240 flop/byte roofline: moderate tiles
    if "v6" in kind:
        return 1024, 2048, 128 << 20         # ~680 flop/byte roofline: big tiles
    if "v7" in kind or "tpu7" in kind:
        return 512, 1024, 64 << 20           # ~320 flop/byte per TC, 64 MiB VMEM per TC
    return 512, 1024, 64 << 20               # unknown chip: conservative


def _pick_tile(dim, preferred, pool_k, align):
    """Largest tile <= preferred that divides dim and keeps the pooled tile a multiple
    of `align` (Mosaic (8,128) block constraint)."""
    if dim <= preferred:
        return dim
    step = pool_k * align
    t = (preferred // step) * step
    while t >= step:
        if dim % t == 0:
            return t
        t -= step
    return dim  # no aligned divisor found: single block along this axis


def _tilewise_mod_perm(n, tile, pool_k):
    """Within each tile of `tile` rows, group rows by (index % pool_k)."""
    base = jnp.arange(0, n, tile, dtype=jnp.int32)[:, None]                      # (n//tile, 1)
    off = jnp.concatenate(
        [jnp.arange(r, tile, pool_k, dtype=jnp.int32) for r in range(pool_k)])   # (tile,)
    return (base + off[None, :]).reshape(-1)


def mp_distance(img_embs, txt_embs, alpha, beta, *, pool_k=POOL_K, tm=None, tn=None,
                out_dtype=jnp.float32, stream_depth=2):
    M, D = img_embs.shape
    N, D2 = txt_embs.shape
    assert D == D2
    assert M % pool_k == 0 and N % pool_k == 0
    Mo, No = M // pool_k, N // pool_k

    tm_pref, tn_pref, phys_vmem = _device_defaults()
    if tm is None:
        tm = _pick_tile(M, tm_pref, pool_k, 8)
    if tn is None:
        tn = _pick_tile(N, tn_pref, pool_k, 128)
    assert M % tm == 0 and N % tn == 0
    assert tm % pool_k == 0 and tn % pool_k == 0
    # Mosaic block constraints for the pooled output tile (imply the input tiles too).
    assert (tm // pool_k) % 8 == 0 or tm == M
    assert (tn // pool_k) % 128 == 0 or tn == N

    # Tile-local grouping by (index % pool_k), fused with the bf16 cast so each operand
    # is rewritten in a single wrapper pass; txt additionally transposed to (D, N) so the
    # kernel contracts on its leading dim (no per-tile MXU-feed transpose).
    img_p = img_embs[_tilewise_mod_perm(M, tm, pool_k)].astype(jnp.bfloat16)          # (M, D)
    txt_p = txt_embs[_tilewise_mod_perm(N, tn, pool_k)].astype(jnp.bfloat16).T         # (D, N)

    n_i, n_j = M // tm, N // tn

    # The inner grid axis re-streams its operand (outer-count) times while the other
    # operand stays VMEM-resident (constant block index over the inner axis).  Orient the
    # grid so the cheaper re-stream is the inner one.
    flip = M * (n_j - 1) < N * (n_i - 1)   # bytes(img re-streamed) < bytes(txt re-streamed)

    def _spec(shape, idx_map, streamed):
        if streamed and stream_depth > 2:
            return pl.BlockSpec(shape, idx_map, pipeline_mode=pl.Buffered(stream_depth))
        return pl.BlockSpec(shape, idx_map)

    tmo, tno = tm // pool_k, tn // pool_k
    if flip:
        grid = (n_j, n_i)
        img_spec = _spec((tm, D), lambda j, i: (i, 0), streamed=True)
        txt_spec = _spec((D, tn), lambda j, i: (0, j), streamed=False)
        out_spec = pl.BlockSpec((tmo, tno), lambda j, i: (i, j))
    else:
        grid = (n_i, n_j)
        img_spec = _spec((tm, D), lambda i, j: (i, 0), streamed=False)
        txt_spec = _spec((D, tn), lambda i, j: (0, j), streamed=True)
        out_spec = pl.BlockSpec((tmo, tno), lambda i, j: (i, j))

    # Rough per-step VMEM working set; raise the scoped limit only when we exceed the
    # default, capped at the chip's physical VMEM.
    est = (2 * 2 * tm * D + max(2, stream_depth) * 2 * tn * D   # bf16 input buffers
           + 2 * 4 * tmo * tno                                  # f32 output buffers
           + 4 * tm * tn + 4 * tmo * tn                         # f32 dist + row-pooled temp
           + (1 << 20))                                         # slack
    cp_kwargs = dict(dimension_semantics=("parallel", "parallel"))
    if est > (32 << 20):
        cp_kwargs["vmem_limit_bytes"] = int(min(phys_vmem, 1.5 * est))

    kernel = functools.partial(_mpdistance_kernel, pool_k=pool_k)

    # NOTE: for very large D (>~2K) add a third "arbitrary" grid axis over D with an f32
    # VMEM accumulator (init/finalize via pl.when) to keep tiles within VMEM on v7x.
    return pl.pallas_call(
        kernel,
        out_shape=jax.ShapeDtypeStruct((Mo, No), out_dtype),
        grid=grid,
        in_specs=[
            pl.BlockSpec(memory_space=pltpu.SMEM),   # alpha (1,)
            pl.BlockSpec(memory_space=pltpu.SMEM),   # beta  (1,)
            img_spec,                                # img tile (tm, D) bf16
            txt_spec,                                # txt tile (D, tn) bf16 (pre-transposed)
        ],
        out_specs=out_spec,
        compiler_params=pltpu.CompilerParams(**cp_kwargs),
    )(alpha, beta, img_p, txt_p)


def _reference(img_embs, txt_embs, alpha, beta, pool_k=POOL_K):
    dist = img_embs @ txt_embs.T
    s = jax.nn.sigmoid(alpha[0] * dist + beta[0])
    M, N = s.shape
    return s.reshape(M // pool_k, pool_k, N // pool_k, pool_k).mean(axis=(1, 3))


if __name__ == "__main__":
    key = jax.random.PRNGKey(0)
    k1, k2 = jax.random.split(key)

    # Parameters matching nn.Parameter(torch.ones(1)) / nn.Parameter(torch.zeros(1)).
    alpha = jnp.ones((1,), jnp.float32)
    beta = jnp.zeros((1,), jnp.float32)

    # Case 1: multi-tile config exercising the (2, 2) grid (flipped orientation:
    # img is the re-streamed operand) with lane-dense pooled output tiles.
    M, N, D = 256, 512, 64
    img = jax.random.normal(k1, (M, D), dtype=jnp.float32)
    txt = jax.random.normal(k2, (N, D), dtype=jnp.float32)
    img = img / jnp.linalg.norm(img, axis=-1, keepdims=True)   # cosine_sim assumes l2-norm
    txt = txt / jnp.linalg.norm(txt, axis=-1, keepdims=True)

    ref = _reference(img, txt, alpha, beta)

    out = jax.block_until_ready(mp_distance(img, txt, alpha, beta, tm=128, tn=256))
    assert out.shape == (M // POOL_K, N // POOL_K)
    # bf16 MXU operands with f32 accumulation: |err| on normalized cos-sim <~ 4e-3,
    # <~ 1e-3 after sigmoid, so 3e-3 gives comfortable margin.
    assert jnp.allclose(out, ref, atol=3e-3), float(jnp.max(jnp.abs(out - ref)))

    # Case 1b: same problem with chip-default tile selection (single-tile path here).
    out_def = jax.block_until_ready(mp_distance(img, txt, alpha, beta))
    assert jnp.allclose(out_def, ref, atol=3e-3), float(jnp.max(jnp.abs(out_def - ref)))

    # Case 2: tiny single-tile config (full-array blocks, no flip).
    k3, k4 = jax.random.split(k1)
    M2, N2, D2 = 16, 16, 32
    img2 = jax.random.normal(k3, (M2, D2), dtype=jnp.float32)
    txt2 = jax.random.normal(k4, (N2, D2), dtype=jnp.float32)
    img2 = img2 / jnp.linalg.norm(img2, axis=-1, keepdims=True)
    txt2 = txt2 / jnp.linalg.norm(txt2, axis=-1, keepdims=True)

    out2 = jax.block_until_ready(mp_distance(img2, txt2, alpha, beta))
    ref2 = _reference(img2, txt2, alpha, beta)
    assert out2.shape == (M2 // POOL_K, N2 // POOL_K)
    assert jnp.allclose(out2, ref2, atol=3e-3), float(jnp.max(jnp.abs(out2 - ref2)))

    print("KERNEL_OK")
</pallas_src>

<mosaic_0001>
module attributes {stable_mosaic.version = 11 : i64} {
  func.func @_mpdistance_kernel(%arg0: i32, %arg1: i32, %arg2: memref<1xf32, #tpu.memory_space<smem>>, %arg3: memref<1xf32, #tpu.memory_space<smem>>, %arg4: memref<128x64xbf16, #tpu.memory_space<vmem>>, %arg5: memref<64x256xbf16, #tpu.memory_space<vmem>>, %arg6: memref<64x128xf32, #tpu.memory_space<vmem>>) attributes {dimension_semantics = [#tpu.dimension_semantics<parallel>, #tpu.dimension_semantics<parallel>], iteration_bounds = array<i64: 2, 2>, scalar_prefetch = 0 : i64, scratch_operands = 0 : i64, tpu.core_type = #tpu.core_type<tc>, window_params = [{transform_indices = @transform_0, window_bounds = array<i64: 1>}, {transform_indices = @transform_1, window_bounds = array<i64: 1>}, {transform_indices = @transform_2, window_bounds = array<i64: 128, 64>}, {transform_indices = @transform_3, window_bounds = array<i64: 64, 256>}, {transform_indices = @transform_4, window_bounds = array<i64: 64, 128>}]} {
    %c0 = arith.constant 0 : index
    %0 = memref.load %arg2[%c0] : memref<1xf32, #tpu.memory_space<smem>>
    %c0_0 = arith.constant 0 : index
    %1 = memref.load %arg3[%c0_0] : memref<1xf32, #tpu.memory_space<smem>>
    %c0_1 = arith.constant 0 : index
    %c0_2 = arith.constant 0 : index
    %2 = vector.load %arg4[%c0_1, %c0_2] : memref<128x64xbf16, #tpu.memory_space<vmem>>, vector<128x64xbf16>
    %c0_3 = arith.constant 0 : index
    %c0_4 = arith.constant 0 : index
    %3 = vector.load %arg5[%c0_3, %c0_4] : memref<64x256xbf16, #tpu.memory_space<vmem>>, vector<64x256xbf16>
    %cst = arith.constant dense<0.000000e+00> : vector<128x256xf32>
    %4 = tpu.matmul %2, %3, %cst {dimension_numbers = #tpu.dot_dimension_numbers<[1], [0], [0], [1], [0, 0, 1, 1], [], []>} : vector<128x64xbf16>, vector<64x256xbf16>, vector<128x256xf32> -> vector<128x256xf32>
    %5 = vector.broadcast %0 : f32 to vector<128x256xf32>
    %6 = arith.mulf %5, %4 : vector<128x256xf32>
    %7 = vector.broadcast %1 : f32 to vector<128x256xf32>
    %8 = arith.addf %6, %7 : vector<128x256xf32>
    %cst_5 = arith.constant 5.000000e-01 : f32
    %9 = vector.broadcast %cst_5 : f32 to vector<128x256xf32>
    %10 = arith.mulf %8, %9 : vector<128x256xf32>
    %11 = math.tanh %10 : vector<128x256xf32>
    %cst_6 = arith.constant 1.000000e+00 : f32
    %12 = vector.broadcast %cst_6 : f32 to vector<128x256xf32>
    %13 = arith.addf %11, %12 : vector<128x256xf32>
    %cst_7 = arith.constant 5.000000e-01 : f32
    %14 = vector.broadcast %cst_7 : f32 to vector<128x256xf32>
    %15 = arith.mulf %14, %13 : vector<128x256xf32>
    %16 = vector.extract_strided_slice %15 {offsets = [0, 0], sizes = [64, 256], strides = [1, 1]} : vector<128x256xf32> to vector<64x256xf32>
    %17 = vector.extract_strided_slice %15 {offsets = [64, 0], sizes = [64, 256], strides = [1, 1]} : vector<128x256xf32> to vector<64x256xf32>
    %18 = arith.addf %16, %17 : vector<64x256xf32>
    %19 = vector.extract_strided_slice %18 {offsets = [0, 0], sizes = [64, 128], strides = [1, 1]} : vector<64x256xf32> to vector<64x128xf32>
    %20 = vector.extract_strided_slice %18 {offsets = [0, 128], sizes = [64, 128], strides = [1, 1]} : vector<64x256xf32> to vector<64x128xf32>
    %21 = arith.addf %19, %20 : vector<64x128xf32>
    %cst_8 = arith.constant 2.500000e-01 : f32
    %22 = vector.broadcast %cst_8 : f32 to vector<64x128xf32>
    %23 = arith.mulf %21, %22 : vector<64x128xf32>
    %c0_9 = arith.constant 0 : index
    %c0_10 = arith.constant 0 : index
    %24 = vector.load %arg6[%c0_9, %c0_10] : memref<64x128xf32, #tpu.memory_space<vmem>>, vector<64x128xf32>
    tpu.vector_store %arg6[%c0_9, %c0_10], %23 {strides = array<i32>} : memref<64x128xf32, #tpu.memory_space<vmem>>, vector<64x128xf32>,
    return
  }
  func.func @transform_0(%arg0: i32, %arg1: i32) -> i32 {
    %c0_i32 = arith.constant 0 : i32
    %c0_i32_0 = arith.constant 0 : i32
    return %c0_i32 : i32
  }
  func.func @transform_1(%arg0: i32, %arg1: i32) -> i32 {
    %c0_i32 = arith.constant 0 : i32
    %c0_i32_0 = arith.constant 0 : i32
    return %c0_i32 : i32
  }
  func.func @transform_2(%arg0: i32, %arg1: i32) -> (i32, i32) {
    %c0_i32 = arith.constant 0 : i32
    %c0_i32_0 = arith.constant 0 : i32
    return %arg1, %c0_i32 : i32, i32
  }
  func.func @transform_3(%arg0: i32, %arg1: i32) -> (i32, i32) {
    %c0_i32 = arith.constant 0 : i32
    %c0_i32_0 = arith.constant 0 : i32
    return %c0_i32, %arg0 : i32, i32
  }
  func.func @transform_4(%arg0: i32, %arg1: i32) -> (i32, i32) {
    %c0_i32 = arith.constant 0 : i32
    return %arg1, %arg0 : i32, i32
  }
}

</mosaic_0001>

<llo_original>
// kernel: tpu_custom_call.1
$region0: #{tpu_custom_call.1}
  #allocation0 [shape = 'u32[]', space=smem, size = 0x4, offset = 0x4, fixed_abs, tag = 'smem constant byte address 0x4 - core index']
  #allocation1 [shape = 'u32[144,128]{1,0:T(1,128)}', space=vmem, size = 0x12000, scoped, tag = 'internal scratch']
  #allocation2 [shape = 'f32[1]{0:T(128)S(6)}', space=smem, size = 0x200, scoped, tag = 'scoped memory for tpu_custom_call.1']
  #allocation3 [shape = 'f32[1]{0:T(128)S(6)}', space=smem, size = 0x200, scoped, tag = 'scoped memory for tpu_custom_call.1']
  %s0 = inlined_call_operand.<no memory space> [shape: f32[1], index: 0, kind: input, shape index: {}]
  %s1 = inlined_call_operand.<no memory space> [shape: f32[1], index: 1, kind: input, shape index: {}]
  %s2 = inlined_call_operand.vmem [shape: bf16[256,64], index: 2, kind: input, shape index: {}]
  %s3 = inlined_call_operand.vmem [shape: bf16[64,512], index: 3, kind: input, shape index: {}]
  %s4 = inlined_call_operand.hbm [shape: f32[128,256], index: 4, kind: output, shape index: {}]
  %s5 = sld [smem:[#allocation0]]
  $region87: #{tpu_custom_call.1} parent=0
    _
  %s7 = ssub.s32 1, %s5
  %s8 = scalar_select 0, %s7, %s5
  %9 = sst [smem:[#allocation2]] %s0
  %10 = sst [smem:[#allocation3]] %s1
  $region1: #{tpu_custom_call.1} parent=0
    #allocation4 [shape = 'u8[65536]{0}', space=vmem, size = 0x10000, scoped, tag = 'input window, operand 3']
    #allocation5 [shape = 'u8[65536]{0}', space=vmem, size = 0x10000, scoped, tag = 'output window, operand 0']
    #allocation6 [shape = 's32[2]{0}', space=sflag, size = 0x8, scoped, tag = 'scoped memory for tpu_custom_call.1']
    %11 = vsyncpa [#allocation6], 0
    %s12 = scalar_lea.sflag [#allocation6], 1
    %13 = vsyncpa %s12, 0
    loop: start=0, step=1, limit=6
    $region2: #{tpu_custom_call.1} parent=1 // loop_pre_header
      _
    $region3: #{tpu_custom_call.1} parent=1 // loop_header
      %s15 = sphi 0, %s19
      %p16 = scmp.ge.s32.totalorder %s15, 6
      %s22 = sphi 0, %s34
      %s23 = sphi 0, %s30
      %s24 = sphi 0, %s22
      %s25 = sphi 0, %s23
      %s26 = sphi 0, %s24
      %s27 = sphi 0, %s25
      %s35 = sphi 0, %s35
      %s37 = sphi 0, %s35
      %s38 = sphi 0, %s37
      %s52 = sphi 0, %s38
      %s56 = sphi 0, %s56
      %s58 = sphi 0, %s56
      %s59 = sphi 0, %s58
      %s73 = sphi 0, %s59
      %s79 = sphi 0, %s81
      %s82 = sphi 0, %s79
      %s83 = sphi 0, %s82
      %s99 = sphi 0, %s83
      %s105 = sphi 0, %s107
      %s108 = sphi 0, %s105
      %s109 = sphi 0, %s108
      %s125 = sphi 0, %s109
      %s133 = sphi 0, %s135
      %s136 = sphi 0, %s133
      %s137 = sphi 0, %s136
      %s153 = sphi 0, %s137
    $region4: #{tpu_custom_call.1} parent=1 // loop_header_branch
      %18 = sbr.rel (%p16) target = $region8
    $region5: #{tpu_custom_call.1} parent=1 // loop_body
      %s20 = ssub.s32 %s15, 1
      %s21 = ssub.s32 %s15, 2
      %s28 = sadd.s32 1, %s23
      %p29 = scmp.ge.s32.totalorder %s28, 2
      %s30 = scalar_select %p29, 0, %s28
      %s31 = sadd.s32 1, %s22
      %s32 = scalar_select %p29, %s31, %s22
      %p33 = scmp.ge.s32.totalorder %s32, 2
      %s34 = scalar_select %p33, 0, %s32
      %s36 = sadd.s32 %s35, 1
      %p39 = scmp.eq.s32.totalorder %s15, 3
      %p40 = scmp.ne.s32.totalorder %s35, %s37
      %p41 = scmp.eq.s32.totalorder %s15, 0
      %p42 = por %p40, %p41
      %p43 = scmp.ne.s32.totalorder %s35, %s37
      %p44 = scmp.eq.s32.totalorder %s20, 3
      %p45 = por %p43, %p44
      %p46 = scmp.ne.s32.totalorder %s37, %s38
      %p47 = scmp.eq.s32.totalorder %s20, 0
      %p48 = por %p46, %p47
      %p49 = scmp.ne.s32.totalorder %s37, %s38
      %p50 = scmp.eq.s32.totalorder %s21, 3
      %p51 = por %p49, %p50
      %p53 = scmp.ne.s32.totalorder %s38, %s52
      %p54 = scmp.eq.s32.totalorder %s21, 0
      %p55 = por %p53, %p54
      %s57 = sadd.s32 %s56, 1
      %p60 = scmp.eq.s32.totalorder %s15, 3
      %p61 = scmp.ne.s32.totalorder %s56, %s58
      %p62 = scmp.eq.s32.totalorder %s15, 0
      %p63 = por %p61, %p62
      %p64 = scmp.ne.s32.totalorder %s56, %s58
      %p65 = scmp.eq.s32.totalorder %s20, 3
      %p66 = por %p64, %p65
      %p67 = scmp.ne.s32.totalorder %s58, %s59
      %p68 = scmp.eq.s32.totalorder %s20, 0
      %p69 = por %p67, %p68
      %p70 = scmp.ne.s32.totalorder %s58, %s59
      %p71 = scmp.eq.s32.totalorder %s21, 3
      %p72 = por %p70, %p71
      %p74 = scmp.ne.s32.totalorder %s59, %s73
      %p75 = scmp.eq.s32.totalorder %s21, 0
      %p76 = por %p74, %p75
      %s77 = ssub.s32 %s23, %s30
      %p78 = scmp.eq.s32.totalorder %s77, 0
      %s80 = sadd.s32 %s79, 1
      %s81 = scalar_select %p78, %s79, %s80
      %p84 = pneg %p78
      %p85 = scmp.eq.s32.totalorder %s15, 3
      %p86 = por %p84, %p85
      %p87 = scmp.ne.s32.totalorder %s79, %s82
      %p88 = scmp.eq.s32.totalorder %s15, 0
      %p89 = por %p87, %p88
      %p90 = scmp.ne.s32.totalorder %s79, %s82
      %p91 = scmp.eq.s32.totalorder %s20, 3
      %p92 = por %p90, %p91
      %p93 = scmp.ne.s32.totalorder %s82, %s83
      %p94 = scmp.eq.s32.totalorder %s20, 0
      %p95 = por %p93, %p94
      %p96 = scmp.ne.s32.totalorder %s82, %s83
      %p97 = scmp.eq.s32.totalorder %s21, 3
      %p98 = por %p96, %p97
      %p100 = scmp.ne.s32.totalorder %s83, %s99
      %p101 = scmp.eq.s32.totalorder %s21, 0
      %p102 = por %p100, %p101
      %s103 = ssub.s32 %s22, %s34
      %p104 = scmp.eq.s32.totalorder %s103, 0
      %s106 = sadd.s32 %s105, 1
      %s107 = scalar_select %p104, %s105, %s106
      %p110 = pneg %p104
      %p111 = scmp.eq.s32.totalorder %s15, 3
      %p112 = por %p110, %p111
      %p113 = scmp.ne.s32.totalorder %s105, %s108
      %p114 = scmp.eq.s32.totalorder %s15, 0
      %p115 = por %p113, %p114
      %p116 = scmp.ne.s32.totalorder %s105, %s108
      %p117 = scmp.eq.s32.totalorder %s20, 3
      %p118 = por %p116, %p117
      %p119 = scmp.ne.s32.totalorder %s108, %s109
      %p120 = scmp.eq.s32.totalorder %s20, 0
      %p121 = por %p119, %p120
      %p122 = scmp.ne.s32.totalorder %s108, %s109
      %p123 = scmp.eq.s32.totalorder %s21, 3
      %p124 = por %p122, %p123
      %p126 = scmp.ne.s32.totalorder %s109, %s125
      %p127 = scmp.eq.s32.totalorder %s21, 0
      %p128 = por %p126, %p127
      %s129 = ssub.s32 %s23, %s30
      %s130 = ssub.s32 %s22, %s34
      %s131 = sor.u32 %s129, %s130
      %p132 = scmp.eq.s32.totalorder %s131, 0
      %s134 = sadd.s32 %s133, 1
      %s135 = scalar_select %p132, %s133, %s134
      %p138 = pneg %p132
      %p139 = scmp.eq.s32.totalorder %s15, 3
      %p140 = por %p138, %p139
      %p141 = scmp.ne.s32.totalorder %s133, %s136
      %p142 = scmp.eq.s32.totalorder %s15, 0
      %p143 = por %p141, %p142
      %p144 = scmp.ne.s32.totalorder %s133, %s136
      %p145 = scmp.eq.s32.totalorder %s20, 3
      %p146 = por %p144, %p145
      %p147 = scmp.ne.s32.totalorder %s136, %s137
      %p148 = scmp.eq.s32.totalorder %s20, 0
      %p149 = por %p147, %p148
      %p150 = scmp.ne.s32.totalorder %s136, %s137
      %p151 = scmp.eq.s32.totalorder %s21, 3
      %p152 = por %p150, %p151
      %p154 = scmp.ne.s32.totalorder %s137, %s153
      %p155 = scmp.eq.s32.totalorder %s21, 0
      %p156 = por %p154, %p155
      %p157 = scmp.le.s32.totalorder 1, %s15
      %p158 = scmp.lt.s32.totalorder %s15, 5
      %p159 = pnand %p157, %p158
      %p160 = pneg %p159
      // Predicated region
      $region9: #{tpu_custom_call.1} parent=5 // pred_check
        _
      $region10: #{tpu_custom_call.1} parent=5 // pred_check_branch
        %162 = sbr.rel (%p159) target = $region12
      $region11: #{tpu_custom_call.1} parent=5 // pred_region
        %s163 = ssub.s32 %s15, 1
        // Predicated region
        $region13: #{tpu_custom_call.1} parent=11 // pred_check
          %p164 = pneg %p48
        $region14: #{tpu_custom_call.1} parent=11 // pred_check_branch
          %166 = sbr.rel (%p164) target = $region16
        $region15: #{tpu_custom_call.1} parent=11 // pred_region
          _
        $region16: #{tpu_custom_call.1} parent=11 // pred_fallthru
          _
        // Predicated region
        $region17: #{tpu_custom_call.1} parent=11 // pred_check
          %p167 = pneg %p69
        $region18: #{tpu_custom_call.1} parent=11 // pred_check_branch
          %169 = sbr.rel (%p167) target = $region20
        $region19: #{tpu_custom_call.1} parent=11 // pred_region
          _
        $region20: #{tpu_custom_call.1} parent=11 // pred_fallthru
          _
      $region12: #{tpu_custom_call.1} parent=5 // pred_fallthru
        _
      %p170 = scmp.lt.s32.totalorder %s15, 4
      // Predicated region
      $region21: #{tpu_custom_call.1} parent=5 // pred_check
        %p171 = pneg %p170
      $region22: #{tpu_custom_call.1} parent=5 // pred_check_branch
        %173 = sbr.rel (%p171) target = $region24
      $region23: #{tpu_custom_call.1} parent=5 // pred_region
        // Predicated region
        $region25: #{tpu_custom_call.1} parent=23 // pred_check
          %p174 = pneg %p89
        $region26: #{tpu_custom_call.1} parent=23 // pred_check_branch
          %176 = sbr.rel (%p174) target = $region28
        $region27: #{tpu_custom_call.1} parent=23 // pred_region
          %s177 = smul.u32 16, %s23
          %p178 = scmp.lt.s32.totalorder %s177, 31
          %s179 = scalar_select %p178, %s177, 31
          %s180 = smul.addr %s179, 4
          %s181 = scalar_lea.vmem %s2, %s180
          %s182 = smul.u32 16, %s23
        $region28: #{tpu_custom_call.1} parent=23 // pred_fallthru
          _
        // Predicated region
        $region29: #{tpu_custom_call.1} parent=23 // pred_check
          %p183 = pneg %p115
        $region30: #{tpu_custom_call.1} parent=23 // pred_check_branch
          %185 = sbr.rel (%p183) target = $region32
        $region31: #{tpu_custom_call.1} parent=23 // pred_region
          %s186 = sand.u32 %s105, 1
          %s187 = sand.u32 %s105, 1
          %s188 = smul.addr %s187, 64
          %s189 = scalar_lea.vmem [#allocation4], %s188
          %s190 = smul.u32 2, %s22
          %s191 = smul.addr %s190, 4
          %s192 = scalar_lea.vmem %s3, %s191
          // Predicated region
          $region33: #{tpu_custom_call.1} parent=31 // pred_check
            _
          $region34: #{tpu_custom_call.1} parent=31 // pred_check_branch
            %194 = sbr.rel (0) target = $region36
          $region35: #{tpu_custom_call.1} parent=31 // pred_region
            // Predicated region
            $region37: #{tpu_custom_call.1} parent=35 // pred_check
              _
            $region38: #{tpu_custom_call.1} parent=35 // pred_check_branch
              %196 = sbr.rel (0) target = $region40
            $region39: #{tpu_custom_call.1} parent=35 // pred_region
              // Predicated region
              $region52: #{tpu_custom_call.1} parent=39 // pred_check
                _
              $region53: #{tpu_custom_call.1} parent=39 // pred_check_branch
                %226 = sbr.rel (0) target = $region55
              $region54: #{tpu_custom_call.1} parent=39 // pred_region
                loop: start=0, step=1, limit=1
                $region56: #{tpu_custom_call.1} parent=54 // loop_pre_header
                  _
                $region57: #{tpu_custom_call.1} parent=54 // loop_header
                  %s228 = sphi 0, %s232
                  %p229 = scmp.ge.s32.totalorder %s228, 1
                  %s233 = sphi %s192, %s192
                  %s234 = sphi %s189, %s189
                $region58: #{tpu_custom_call.1} parent=54 // loop_header_branch
                  %231 = sbr.rel (%p229) target = $region62
                $region59: #{tpu_custom_call.1} parent=54 // loop_body
                  %v235 = vld [vmem:[%s233] sm:$0xff]
                  %236 = vst [vmem:[%s234] sm:$0xff] %v235
                  %v237 = vld [vmem:[%s233 + $0x10] sm:$0xff]
                  %238 = vst [vmem:[%s234 + $0x8] sm:$0xff] %v237
                  %v239 = vld [vmem:[%s233 + $0x20] sm:$0xff]
                  %240 = vst [vmem:[%s234 + $0x10] sm:$0xff] %v239
                  %v241 = vld [vmem:[%s233 + $0x30] sm:$0xff]
                  %242 = vst [vmem:[%s234 + $0x18] sm:$0xff] %v241
                  %v243 = vld [vmem:[%s233 + $0x40] sm:$0xff]
                  %244 = vst [vmem:[%s234 + $0x20] sm:$0xff] %v243
                  %v245 = vld [vmem:[%s233 + $0x50] sm:$0xff]
                  %246 = vst [vmem:[%s234 + $0x28] sm:$0xff] %v245
                  %v247 = vld [vmem:[%s233 + $0x60] sm:$0xff]
                  %248 = vst [vmem:[%s234 + $0x30] sm:$0xff] %v247
                  %v249 = vld [vmem:[%s233 + $0x70] sm:$0xff]
                  %250 = vst [vmem:[%s234 + $0x38] sm:$0xff] %v249
                $region60: #{tpu_custom_call.1} parent=54 // loop_footer
                  %s232 = sadd.s32 1, %s228
                $region61: #{tpu_custom_call.1} parent=54 // loop_footer_branch
                  %227 = sbr.rel target = $region57
                $region62: #{tpu_custom_call.1} parent=54 // loop_exit
                  _
              $region55: #{tpu_custom_call.1} parent=39 // pred_fallthru
                _
              // Predicated region
              $region63: #{tpu_custom_call.1} parent=39 // pred_check
                _
              $region64: #{tpu_custom_call.1} parent=39 // pred_check_branch
                %252 = sbr.rel target = $region66
              $region65: #{tpu_custom_call.1} parent=39 // pred_region
                _
              $region66: #{tpu_custom_call.1} parent=39 // pred_fallthru
                _
            $region40: #{tpu_custom_call.1} parent=35 // pred_fallthru
              _
            // Predicated region
            $region41: #{tpu_custom_call.1} parent=35 // pred_check
              _
            $region42: #{tpu_custom_call.1} parent=35 // pred_check_branch
              %198 = sbr.rel target = $region44
            $region43: #{tpu_custom_call.1} parent=35 // pred_region
              %s200 = ssub.s32 256, 1
              loop: start=0, step=1, limit=1
              $region45: #{tpu_custom_call.1} parent=43 // loop_pre_header
                _
              $region46: #{tpu_custom_call.1} parent=43 // loop_header
                %s202 = sphi 0, %s206
                %p203 = scmp.ge.s32.totalorder %s202, 1
                %s207 = sphi %s192, %s192
                %s208 = sphi %s189, %s189
              $region47: #{tpu_custom_call.1} parent=43 // loop_header_branch
                %205 = sbr.rel (%p203) target = $region51
              $region48: #{tpu_custom_call.1} parent=43 // loop_body
                %v209 = vld [vmem:[%s207] sm:%s200]
                %210 = vst [vmem:[%s208] sm:%s200] %v209
                %v211 = vld [vmem:[%s207 + $0x10] sm:%s200]
                %212 = vst [vmem:[%s208 + $0x8] sm:%s200] %v211
                %v213 = vld [vmem:[%s207 + $0x20] sm:%s200]
                %214 = vst [vmem:[%s208 + $0x10] sm:%s200] %v213
                %v215 = vld [vmem:[%s207 + $0x30] sm:%s200]
                %216 = vst [vmem:[%s208 + $0x18] sm:%s200] %v215
                %v217 = vld [vmem:[%s207 + $0x40] sm:%s200]
                %218 = vst [vmem:[%s208 + $0x20] sm:%s200] %v217
                %v219 = vld [vmem:[%s207 + $0x50] sm:%s200]
                %220 = vst [vmem:[%s208 + $0x28] sm:%s200] %v219
                %v221 = vld [vmem:[%s207 + $0x60] sm:%s200]
                %222 = vst [vmem:[%s208 + $0x30] sm:%s200] %v221
                %v223 = vld [vmem:[%s207 + $0x70] sm:%s200]
                %224 = vst [vmem:[%s208 + $0x38] sm:%s200] %v223
              $region49: #{tpu_custom_call.1} parent=43 // loop_footer
                %s206 = sadd.s32 1, %s202
              $region50: #{tpu_custom_call.1} parent=43 // loop_footer_branch
                %201 = sbr.rel target = $region46
              $region51: #{tpu_custom_call.1} parent=43 // loop_exit
                _
            $region44: #{tpu_custom_call.1} parent=35 // pred_fallthru
              _
          $region36: #{tpu_custom_call.1} parent=31 // pred_fallthru
            _
          %253 = vnop
        $region32: #{tpu_custom_call.1} parent=23 // pred_fallthru
          _
      $region24: #{tpu_custom_call.1} parent=5 // pred_fallthru
        _
      %p254 = scmp.le.s32.totalorder 1, %s15
      %p255 = scmp.lt.s32.totalorder %s15, 5
      %p256 = pnand %p254, %p255
      %p257 = pneg %p256
      // Predicated region
      $region67: #{tpu_custom_call.1} parent=5 // pred_check
        _
      $region68: #{tpu_custom_call.1} parent=5 // pred_check_branch
        %259 = sbr.rel (%p256) target = $region70
      $region69: #{tpu_custom_call.1} parent=5 // pred_region
        %s260 = ssub.s32 %s15, 1
        %s261 = sand.u32 %s108, 1
        %s262 = sand.u32 %s108, 1
        %s263 = smul.addr %s262, 64
        %s264 = scalar_lea.vmem [#allocation4], %s263
        // Predicated region
        $region71: #{tpu_custom_call.1} parent=69 // pred_check
          %p265 = pneg %p121
        $region72: #{tpu_custom_call.1} parent=69 // pred_check_branch
          %267 = sbr.rel (%p265) target = $region74
        $region73: #{tpu_custom_call.1} parent=69 // pred_region
          _
        $region74: #{tpu_custom_call.1} parent=69 // pred_fallthru
          _
        %p268 = pneg %p48
        %p269 = pneg %p45
        %p270 = pneg %p69
        %p271 = pneg %p66
        %s272 = smul.u32 16, %s25
        %p273 = scmp.lt.s32.totalorder %s272, 31
        %s274 = scalar_select %p273, %s272, 31
        %s275 = smul.addr %s274, 4
        %s276 = scalar_lea.vmem %s2, %s275
        %p277 = pneg %p95
        %p278 = pneg %p92
        %s279 = sand.u32 %s108, 1
        %s280 = sand.u32 %s108, 1
        %s281 = smul.addr %s280, 64
        %s282 = scalar_lea.vmem [#allocation4], %s281
        %p283 = pneg %p121
        %p284 = pneg %p118
        %p285 = pneg %p149
        %p286 = pneg %p146
        %s287 = sand.u32 %s136, 1
        %s288 = scalar_lea.sflag [#allocation6], %s287
        %s289 = sand.u32 %s136, 1
        %s290 = smul.addr %s289, 64
        %s291 = scalar_lea.vmem [#allocation5], %s290
        %s292 = smul.u32 16, %s25
        %p293 = scmp.lt.s32.totalorder %s292, 31
        %s294 = scalar_select %p293, %s292, 31
        %s295 = smul.addr %s294, 4
        %s296 = scalar_lea.vmem %s2, %s295
        %s297 = smul.u32 16, %s25
        %s298 = smul.u32 2, %s24
        %s299 = smul.u32 8, %s25
        %s301 = sld [smem:[#allocation2]]
        %s302 = sld [smem:[#allocation3]]
        %v303 = vld [vmem:[%s296] sm:$0xf]
        %v304 = vld [vmem:[%s296 + $0x4] sm:$0xf]
        %v305 = vld [vmem:[%s296 + $0x8] sm:$0xf]
        %v306 = vld [vmem:[%s296 + $0xc] sm:$0xf]
        %v307 = vld [vmem:[%s296 + $0x10] sm:$0xf]
        %v308 = vld [vmem:[%s296 + $0x14] sm:$0xf]
        %v309 = vld [vmem:[%s296 + $0x18] sm:$0xf]
        %v310 = vld [vmem:[%s296 + $0x1c] sm:$0xf]
        %v311 = vld [vmem:[%s296 + $0x20] sm:$0xf]
        %v312 = vld [vmem:[%s296 + $0x24] sm:$0xf]
        %v313 = vld [vmem:[%s296 + $0x28] sm:$0xf]
        %v314 = vld [vmem:[%s296 + $0x2c] sm:$0xf]
        %v315 = vld [vmem:[%s296 + $0x30] sm:$0xf]
        %v316 = vld [vmem:[%s296 + $0x34] sm:$0xf]
        %v317 = vld [vmem:[%s296 + $0x38] sm:$0xf]
        %v318 = vld [vmem:[%s296 + $0x3c] sm:$0xf]
        %v319 = vld [vmem:[%s264] sm:$0xff]
        %v320 = vld [vmem:[%s264 + $0x8] sm:$0xff]
        %v321 = vld [vmem:[%s264 + $0x10] sm:$0xff]
        %v322 = vld [vmem:[%s264 + $0x18] sm:$0xff]
        %v323 = vld [vmem:[%s264 + $0x20] sm:$0xff]
        %v324 = vld [vmem:[%s264 + $0x28] sm:$0xff]
        %v325 = vld [vmem:[%s264 + $0x30] sm:$0xff]
        %v326 = vld [vmem:[%s264 + $0x38] sm:$0xff]
        %v343 = vunpack.c.l.b16 %v303
        %v344 = vunpack.c.l.b16 %v304
        %v345 = vunpack.c.l.b16 %v305
        %v346 = vunpack.c.l.b16 %v306
        %v347 = vunpack.c.l.b16 %v307
        %v348 = vunpack.c.l.b16 %v308
        %v349 = vunpack.c.l.b16 %v309
        %v350 = vunpack.c.l.b16 %v310
        %v351 = vunpack.c.l.b16 %v311
        %v352 = vunpack.c.l.b16 %v312
        %v353 = vunpack.c.l.b16 %v313
        %v354 = vunpack.c.l.b16 %v314
        %v355 = vunpack.c.l.b16 %v315
        %v356 = vunpack.c.l.b16 %v316
        %v357 = vunpack.c.l.b16 %v317
        %v358 = vunpack.c.l.b16 %v318
        %v359 = vpack.c.b16 %v344, %v343
        %v360 = vpack.c.b16 %v346, %v345
        %v361 = vpack.c.b16 %v348, %v347
        %v362 = vpack.c.b16 %v350, %v349
        %v363 = vpack.c.b16 %v352, %v351
        %v364 = vpack.c.b16 %v354, %v353
        %v365 = vpack.c.b16 %v356, %v355
        %v366 = vpack.c.b16 %v358, %v357
        %v375 = vunpack.c.l.b16 %v319
        %v376 = vunpack.c.h.b16 %v319
        %v377 = vunpack.c.l.b16 %v320
        %v378 = vunpack.c.h.b16 %v320
        %v379 = vunpack.c.l.b16 %v321
        %v380 = vunpack.c.h.b16 %v321
        %v381 = vunpack.c.l.b16 %v322
        %v382 = vunpack.c.h.b16 %v322
        %v383 = vunpack.c.l.b16 %v323
        %v384 = vunpack.c.h.b16 %v323
        %v385 = vunpack.c.l.b16 %v324
        %v386 = vunpack.c.h.b16 %v324
        %v387 = vunpack.c.l.b16 %v325
        %v388 = vunpack.c.h.b16 %v325
        %v389 = vunpack.c.l.b16 %v326
        %v390 = vunpack.c.h.b16 %v326
        %v391 = vpack.c.b16 %v377, %v375
        %v392 = vpack.c.b16 %v378, %v376
        %v393 = vpack.c.b16 %v381, %v379
        %v394 = vpack.c.b16 %v382, %v380
        %v395 = vpack.c.b16 %v385, %v383
        %v396 = vpack.c.b16 %v386, %v384
        %v397 = vpack.c.b16 %v389, %v387
        %v398 = vpack.c.b16 %v390, %v388
        %vm407 = vcmask 523264
        %v409 = vsel %vm407, %v359, 0
        %v412 = vsel %vm407, %v360, 0
        %v415 = vsel %vm407, %v361, 0
        %v418 = vsel %vm407, %v362, 0
        %v421 = vsel %vm407, %v363, 0
        %v424 = vsel %vm407, %v364, 0
        %v427 = vsel %vm407, %v365, 0
        %v430 = vsel %vm407, %v366, 0
        %432 = vmatprep.subr.bf16.mxu0 0
        %433 = vmatpush1.bf16.msra.mxu0 0
        %434 = vmatprep.subr.bf16.mxu0 0
        %435 = vmatpush1.bf16.msra.mxu0 0
        %436 = vmatprep.subr.bf16.mxu0 0
        %437 = vmatpush1.bf16.msra.mxu0 0
        %438 = vmatprep.subr.bf16.mxu0 0
        %439 = vmatpush1.bf16.msra.mxu0 0
        %440 = vmatprep.subr.bf16.mxu0 %v398
        %441 = vmatpush1.bf16.msra.mxu0 %v397
        %442 = vmatprep.subr.bf16.mxu0 %v396
        %443 = vmatpush1.bf16.msra.mxu0 %v395
        %444 = vmatprep.subr.bf16.mxu0 %v394
        %445 = vmatpush1.bf16.msra.mxu0 %v393
        %446 = vmatprep.subr.bf16.mxu0 %v392
        %447 = vmatpush1.bf16.msra.mxu0 %v391
        %448 = vmatprep.subr.bf16.mxu0 0
        %449 = vmatpush2.bf16.msra.mxu0 0
        %450 = vmatprep.subr.bf16.mxu0 0
        %451 = vmatpush2.bf16.msra.mxu0 0
        %452 = vmatprep.subr.bf16.mxu0 0
        %453 = vmatpush2.bf16.msra.mxu0 0
        %454 = vmatprep.subr.bf16.mxu0 0
        %455 = vmatpush2.bf16.msra.mxu0 0
        %456 = vmatprep.subr.bf16.mxu0 0
        %457 = vmatpush2.bf16.msra.mxu0 0
        %458 = vmatprep.subr.bf16.mxu0 0
        %459 = vmatpush2.bf16.msra.mxu0 0
        %460 = vmatprep.subr.bf16.mxu0 0
        %461 = vmatpush2.bf16.msra.mxu0 0
        %462 = vmatprep.subr.bf16.mxu0 0
        %463 = vmatpush2.bf16.msra.mxu0 0
        %464 = vmatprep.mubr.bf16.mxu0 0
        %465 = vmatmul.mubr.bf16.gmra.mxu0 %v409
        %v466 = vpop.f32.mrf.mxu0
        %v467 = vadd.f32 0.0, %v466
        %v468 = vpop.f32.mrf.mxu0
        %v469 = vadd.f32 0.0, %v468
        %v470 = vpop.f32.mrf.mxu0
        %v471 = vadd.f32 0.0, %v470
        %v472 = vpop.f32.mrf.mxu0
        %v473 = vadd.f32 0.0, %v472
        %474 = vmatprep.mubr.bf16.mxu0 0
        %475 = vmatmul.mubr.bf16.gmra.mxu0 %v412
        %v476 = vpop.f32.mrf.mxu0
        %v477 = vadd.f32 0.0, %v476
        %v478 = vpop.f32.mrf.mxu0
        %v479 = vadd.f32 0.0, %v478
        %v480 = vpop.f32.mrf.mxu0
        %v481 = vadd.f32 0.0, %v480
        %v482 = vpop.f32.mrf.mxu0
        %v483 = vadd.f32 0.0, %v482
        %484 = vmatprep.mubr.bf16.mxu0 0
        %485 = vmatmul.mubr.bf16.gmra.mxu0 %v415
        %v486 = vpop.f32.mrf.mxu0
        %v487 = vadd.f32 0.0, %v486
        %v488 = vpop.f32.mrf.mxu0
        %v489 = vadd.f32 0.0, %v488
        %v490 = vpop.f32.mrf.mxu0
        %v491 = vadd.f32 0.0, %v490
        %v492 = vpop.f32.mrf.mxu0
        %v493 = vadd.f32 0.0, %v492
        %494 = vmatprep.mubr.bf16.mxu0 0
        %495 = vmatmul.mubr.bf16.gmra.mxu0 %v418
        %v496 = vpop.f32.mrf.mxu0
        %v497 = vadd.f32 0.0, %v496
        %v498 = vpop.f32.mrf.mxu0
        %v499 = vadd.f32 0.0, %v498
        %v500 = vpop.f32.mrf.mxu0
        %v501 = vadd.f32 0.0, %v500
        %v502 = vpop.f32.mrf.mxu0
        %v503 = vadd.f32 0.0, %v502
        %504 = vmatprep.mubr.bf16.mxu0 0
        %505 = vmatmul.mubr.bf16.gmra.mxu0 %v421
        %v506 = vpop.f32.mrf.mxu0
        %v507 = vadd.f32 0.0, %v506
        %v508 = vpop.f32.mrf.mxu0
        %v509 = vadd.f32 0.0, %v508
        %v510 = vpop.f32.mrf.mxu0
        %v511 = vadd.f32 0.0, %v510
        %v512 = vpop.f32.mrf.mxu0
        %v513 = vadd.f32 0.0, %v512
        %514 = vmatprep.mubr.bf16.mxu0 0
        %515 = vmatmul.mubr.bf16.gmra.mxu0 %v424
        %v516 = vpop.f32.mrf.mxu0
        %v517 = vadd.f32 0.0, %v516
        %v518 = vpop.f32.mrf.mxu0
        %v519 = vadd.f32 0.0, %v518
        %v520 = vpop.f32.mrf.mxu0
        %v521 = vadd.f32 0.0, %v520
        %v522 = vpop.f32.mrf.mxu0
        %v523 = vadd.f32 0.0, %v522
        %524 = vmatprep.mubr.bf16.mxu0 0
        %525 = vmatmul.mubr.bf16.gmra.mxu0 %v427
        %v526 = vpop.f32.mrf.mxu0
        %v527 = vadd.f32 0.0, %v526
        %v528 = vpop.f32.mrf.mxu0
        %v529 = vadd.f32 0.0, %v528
        %v530 = vpop.f32.mrf.mxu0
        %v531 = vadd.f32 0.0, %v530
        %v532 = vpop.f32.mrf.mxu0
        %v533 = vadd.f32 0.0, %v532
        %534 = vmatprep.mubr.bf16.mxu0 0
        %535 = vmatmul.mubr.bf16.gmra.mxu0 %v430
        %v536 = vpop.f32.mrf.mxu0
        %v537 = vadd.f32 0.0, %v536
        %v538 = vpop.f32.mrf.mxu0
        %v539 = vadd.f32 0.0, %v538
        %v540 = vpop.f32.mrf.mxu0
        %v541 = vadd.f32 0.0, %v540
        %v542 = vpop.f32.mrf.mxu0
        %v543 = vadd.f32 0.0, %v542
        %544 = vdwg.mxu0
        %v545 = vstv %s301
        %v546 = vmul.f32 %v545, %v467
        %v547 = vmul.f32 %v545, %v469
        %v548 = vmul.f32 %v545, %v471
        %v549 = vmul.f32 %v545, %v473
        %v550 = vmul.f32 %v545, %v477
        %v551 = vmul.f32 %v545, %v479
        %v552 = vmul.f32 %v545, %v481
        %v553 = vmul.f32 %v545, %v483
        %v554 = vmul.f32 %v545, %v487
        %v555 = vmul.f32 %v545, %v489
        %v556 = vmul.f32 %v545, %v491
        %v557 = vmul.f32 %v545, %v493
        %v558 = vmul.f32 %v545, %v497
        %v559 = vmul.f32 %v545, %v499
        %v560 = vmul.f32 %v545, %v501
        %v561 = vmul.f32 %v545, %v503
        %v562 = vmul.f32 %v545, %v507
        %v563 = vmul.f32 %v545, %v509
        %v564 = vmul.f32 %v545, %v511
        %v565 = vmul.f32 %v545, %v513
        %v566 = vmul.f32 %v545, %v517
        %v567 = vmul.f32 %v545, %v519
        %v568 = vmul.f32 %v545, %v521
        %v569 = vmul.f32 %v545, %v523
        %v570 = vmul.f32 %v545, %v527
        %v571 = vmul.f32 %v545, %v529
        %v572 = vmul.f32 %v545, %v531
        %v573 = vmul.f32 %v545, %v533
        %v574 = vmul.f32 %v545, %v537
        %v575 = vmul.f32 %v545, %v539
        %v576 = vmul.f32 %v545, %v541
        %v577 = vmul.f32 %v545, %v543
        %v578 = vstv %s302
        %v579 = vadd.f32 %v546, %v578
        %v580 = vadd.f32 %v547, %v578
        %v581 = vadd.f32 %v548, %v578
        %v582 = vadd.f32 %v549, %v578
        %v583 = vadd.f32 %v550, %v578
        %v584 = vadd.f32 %v551, %v578
        %v585 = vadd.f32 %v552, %v578
        %v586 = vadd.f32 %v553, %v578
        %v587 = vadd.f32 %v554, %v578
        %v588 = vadd.f32 %v555, %v578
        %v589 = vadd.f32 %v556, %v578
        %v590 = vadd.f32 %v557, %v578
        %v591 = vadd.f32 %v558, %v578
        %v592 = vadd.f32 %v559, %v578
        %v593 = vadd.f32 %v560, %v578
        %v594 = vadd.f32 %v561, %v578
        %v595 = vadd.f32 %v562, %v578
        %v596 = vadd.f32 %v563, %v578
        %v597 = vadd.f32 %v564, %v578
        %v598 = vadd.f32 %v565, %v578
        %v599 = vadd.f32 %v566, %v578
        %v600 = vadd.f32 %v567, %v578
        %v601 = vadd.f32 %v568, %v578
        %v602 = vadd.f32 %v569, %v578
        %v603 = vadd.f32 %v570, %v578
        %v604 = vadd.f32 %v571, %v578
        %v605 = vadd.f32 %v572, %v578
        %v606 = vadd.f32 %v573, %v578
        %v607 = vadd.f32 %v574, %v578
        %v608 = vadd.f32 %v575, %v578
        %v609 = vadd.f32 %v576, %v578
        %v610 = vadd.f32 %v577, %v578
        %v611 = vmul.f32 %v579, 0.5
        %v612 = vmul.f32 %v580, 0.5
        %v613 = vmul.f32 %v581, 0.5
        %v614 = vmul.f32 %v582, 0.5
        %v615 = vmul.f32 %v583, 0.5
        %v616 = vmul.f32 %v584, 0.5
        %v617 = vmul.f32 %v585, 0.5
        %v618 = vmul.f32 %v586, 0.5
        %v619 = vmul.f32 %v587, 0.5
        %v620 = vmul.f32 %v588, 0.5
        %v621 = vmul.f32 %v589, 0.5
        %v622 = vmul.f32 %v590, 0.5
        %v623 = vmul.f32 %v591, 0.5
        %v624 = vmul.f32 %v592, 0.5
        %v625 = vmul.f32 %v593, 0.5
        %v626 = vmul.f32 %v594, 0.5
        %v627 = vmul.f32 %v595, 0.5
        %v628 = vmul.f32 %v596, 0.5
        %v629 = vmul.f32 %v597, 0.5
        %v630 = vmul.f32 %v598, 0.5
        %v631 = vmul.f32 %v599, 0.5
        %v632 = vmul.f32 %v600, 0.5
        %v633 = vmul.f32 %v601, 0.5
        %v634 = vmul.f32 %v602, 0.5
        %v635 = vmul.f32 %v603, 0.5
        %v636 = vmul.f32 %v604, 0.5
        %v637 = vmul.f32 %v605, 0.5
        %v638 = vmul.f32 %v606, 0.5
        %v639 = vmul.f32 %v607, 0.5
        %v640 = vmul.f32 %v608, 0.5
        %v641 = vmul.f32 %v609, 0.5
        %v642 = vmul.f32 %v610, 0.5
        %v643 = vtanh.pop %v611
        %v644 = vtanh.pop %v612
        %v645 = vtanh.pop %v613
        %v646 = vtanh.pop %v614
        %v647 = vtanh.pop %v615
        %v648 = vtanh.pop %v616
        %v649 = vtanh.pop %v617
        %v650 = vtanh.pop %v618
        %v651 = vtanh.pop %v619
        %v652 = vtanh.pop %v620
        %v653 = vtanh.pop %v621
        %v654 = vtanh.pop %v622
        %v655 = vtanh.pop %v623
        %v656 = vtanh.pop %v624
        %v657 = vtanh.pop %v625
        %v658 = vtanh.pop %v626
        %v659 = vtanh.pop %v627
        %v660 = vtanh.pop %v628
        %v661 = vtanh.pop %v629
        %v662 = vtanh.pop %v630
        %v663 = vtanh.pop %v631
        %v664 = vtanh.pop %v632
        %v665 = vtanh.pop %v633
        %v666 = vtanh.pop %v634
        %v667 = vtanh.pop %v635
        %v668 = vtanh.pop %v636
        %v669 = vtanh.pop %v637
        %v670 = vtanh.pop %v638
        %v671 = vtanh.pop %v639
        %v672 = vtanh.pop %v640
        %v673 = vtanh.pop %v641
        %v674 = vtanh.pop %v642
        %v675 = vadd.f32 %v643, 1.0
        %v676 = vadd.f32 %v644, 1.0
        %v677 = vadd.f32 %v645, 1.0
        %v678 = vadd.f32 %v646, 1.0
        %v679 = vadd.f32 %v647, 1.0
        %v680 = vadd.f32 %v648, 1.0
        %v681 = vadd.f32 %v649, 1.0
        %v682 = vadd.f32 %v650, 1.0
        %v683 = vadd.f32 %v651, 1.0
        %v684 = vadd.f32 %v652, 1.0
        %v685 = vadd.f32 %v653, 1.0
        %v686 = vadd.f32 %v654, 1.0
        %v687 = vadd.f32 %v655, 1.0
        %v688 = vadd.f32 %v656, 1.0
        %v689 = vadd.f32 %v657, 1.0
        %v690 = vadd.f32 %v658, 1.0
        %v691 = vadd.f32 %v659, 1.0
        %v692 = vadd.f32 %v660, 1.0
        %v693 = vadd.f32 %v661, 1.0
        %v694 = vadd.f32 %v662, 1.0
        %v695 = vadd.f32 %v663, 1.0
        %v696 = vadd.f32 %v664, 1.0
        %v697 = vadd.f32 %v665, 1.0
        %v698 = vadd.f32 %v666, 1.0
        %v699 = vadd.f32 %v667, 1.0
        %v700 = vadd.f32 %v668, 1.0
        %v701 = vadd.f32 %v669, 1.0
        %v702 = vadd.f32 %v670, 1.0
        %v703 = vadd.f32 %v671, 1.0
        %v704 = vadd.f32 %v672, 1.0
        %v705 = vadd.f32 %v673, 1.0
        %v706 = vadd.f32 %v674, 1.0
        %v707 = vmul.f32 %v675, 0.5
        %v708 = vmul.f32 %v676, 0.5
        %v709 = vmul.f32 %v677, 0.5
        %v710 = vmul.f32 %v678, 0.5
        %v711 = vmul.f32 %v679, 0.5
        %v712 = vmul.f32 %v680, 0.5
        %v713 = vmul.f32 %v681, 0.5
        %v714 = vmul.f32 %v682, 0.5
        %v715 = vmul.f32 %v683, 0.5
        %v716 = vmul.f32 %v684, 0.5
        %v717 = vmul.f32 %v685, 0.5
        %v718 = vmul.f32 %v686, 0.5
        %v719 = vmul.f32 %v687, 0.5
        %v720 = vmul.f32 %v688, 0.5
        %v721 = vmul.f32 %v689, 0.5
        %v722 = vmul.f32 %v690, 0.5
        %v723 = vmul.f32 %v691, 0.5
        %v724 = vmul.f32 %v692, 0.5
        %v725 = vmul.f32 %v693, 0.5
        %v726 = vmul.f32 %v694, 0.5
        %v727 = vmul.f32 %v695, 0.5
        %v728 = vmul.f32 %v696, 0.5
        %v729 = vmul.f32 %v697, 0.5
        %v730 = vmul.f32 %v698, 0.5
        %v731 = vmul.f32 %v699, 0.5
        %v732 = vmul.f32 %v700, 0.5
        %v733 = vmul.f32 %v701, 0.5
        %v734 = vmul.f32 %v702, 0.5
        %v735 = vmul.f32 %v703, 0.5
        %v736 = vmul.f32 %v704, 0.5
        %v737 = vmul.f32 %v705, 0.5
        %v738 = vmul.f32 %v706, 0.5
        %v739 = vadd.f32 %v707, %v723
        %v740 = vadd.f32 %v708, %v724
        %v741 = vadd.f32 %v709, %v725
        %v742 = vadd.f32 %v710, %v726
        %v743 = vadd.f32 %v711, %v727
        %v744 = vadd.f32 %v712, %v728
        %v745 = vadd.f32 %v713, %v729
        %v746 = vadd.f32 %v714, %v730
        %v747 = vadd.f32 %v715, %v731
        %v748 = vadd.f32 %v716, %v732
        %v749 = vadd.f32 %v717, %v733
        %v750 = vadd.f32 %v718, %v734
        %v751 = vadd.f32 %v719, %v735
        %v752 = vadd.f32 %v720, %v736
        %v753 = vadd.f32 %v721, %v737
        %v754 = vadd.f32 %v722, %v738
        %v755 = vadd.f32 %v739, %v740
        %v756 = vadd.f32 %v741, %v742
        %v757 = vadd.f32 %v743, %v744
        %v758 = vadd.f32 %v745, %v746
        %v759 = vadd.f32 %v747, %v748
        %v760 = vadd.f32 %v749, %v750
        %v761 = vadd.f32 %v751, %v752
        %v762 = vadd.f32 %v753, %v754
        %v763 = vmul.f32 %v755, 0.25
        %v764 = vmul.f32 %v756, 0.25
        %v765 = vmul.f32 %v757, 0.25
        %v766 = vmul.f32 %v758, 0.25
        %v767 = vmul.f32 %v759, 0.25
        %v768 = vmul.f32 %v760, 0.25
        %v769 = vmul.f32 %v761, 0.25
        %v770 = vmul.f32 %v762, 0.25
        %771 = vst [vmem:[%s291] sm:$0xff] %v763
        %772 = vst [vmem:[%s291 + $0x8] sm:$0xff] %v764
        %773 = vst [vmem:[%s291 + $0x10] sm:$0xff] %v765
        %774 = vst [vmem:[%s291 + $0x18] sm:$0xff] %v766
        %775 = vst [vmem:[%s291 + $0x20] sm:$0xff] %v767
        %776 = vst [vmem:[%s291 + $0x28] sm:$0xff] %v768
        %777 = vst [vmem:[%s291 + $0x30] sm:$0xff] %v769
        %778 = vst [vmem:[%s291 + $0x38] sm:$0xff] %v770
        %s779 = sand.u32 %s136, 1
        %s780 = scalar_lea.sflag [#allocation6], %s779
        %s781 = sand.u32 %s136, 1
        %s782 = smul.addr %s781, 64
        %s783 = scalar_lea.vmem [#allocation5], %s782
        // Predicated region
        $region75: #{tpu_custom_call.1} parent=69 // pred_check
          %p784 = pneg %p146
        $region76: #{tpu_custom_call.1} parent=69 // pred_check_branch
          %786 = sbr.rel (%p784) target = $region78
        $region77: #{tpu_custom_call.1} parent=69 // pred_region
          %s787 = smul.u32 8, %s25
          %s789 = ssub.s32 1024, 1024
          %790 = vsyncadd %s780, %s789
          %s791 = smul.addr %s787, 2
          %s792 = sadd.s32 %s24, %s791
          %s793 = smul.addr %s792, 128
          %s794 = scalar_lea.hbm %s4, %s793
          %s795 = sshll.u32 %s783, 4
          %s796 = int_to_ptr.vmem [resolvable:$true] %s795
          %801 = dma.vmem_to_hbm [thread:$0]  %s796, 1024, %s794, %s780, 128, 256, 8
        $region78: #{tpu_custom_call.1} parent=69 // pred_fallthru
          _
      $region70: #{tpu_custom_call.1} parent=5 // pred_fallthru
        _
      %p802 = scmp.le.s32.totalorder 2, %s15
      // Predicated region
      $region79: #{tpu_custom_call.1} parent=5 // pred_check
        %p803 = pneg %p802
      $region80: #{tpu_custom_call.1} parent=5 // pred_check_branch
        %805 = sbr.rel (%p803) target = $region82
      $region81: #{tpu_custom_call.1} parent=5 // pred_region
        %s806 = ssub.s32 %s15, 2
        // Predicated region
        $region83: #{tpu_custom_call.1} parent=81 // pred_check
          %p807 = pneg %p152
        $region84: #{tpu_custom_call.1} parent=81 // pred_check_branch
          %809 = sbr.rel (%p807) target = $region86
        $region85: #{tpu_custom_call.1} parent=81 // pred_region
          %s810 = sand.u32 %s137, 1
          %s811 = scalar_lea.sflag [#allocation6], %s810
          %s812 = sand.u32 %s137, 1
          %s813 = smul.addr %s812, 64
          %s814 = scalar_lea.vmem [#allocation5], %s813
          %815 = dma.done %s811, 1024
        $region86: #{tpu_custom_call.1} parent=81 // pred_fallthru
          _
      $region82: #{tpu_custom_call.1} parent=5 // pred_fallthru
        _
    $region6: #{tpu_custom_call.1} parent=1 // loop_footer
      %s19 = sadd.s32 1, %s15
    $region7: #{tpu_custom_call.1} parent=1 // loop_footer_branch
      %14 = sbr.rel target = $region3
    $region8: #{tpu_custom_call.1} parent=1 // loop_exit
      _
    %816 = vsyncpa [#allocation6], 1
    %s817 = scalar_lea.sflag [#allocation6], 1
    %818 = vsyncpa %s817, 1

</llo_original>
